<compile_context>
chip_gen: v7x
topology: tpu7x:2x2x1
jax: 0.10.0
libtpu: 0.0.40
codegen_flags: <defaults>
</compile_context>

<pallas_src>
import jax
import jax.numpy as jnp
from jax.experimental import pallas as pl
from jax.experimental.pallas import tpu as pltpu


# ----------------------------------------------------------------------------
# Kernel body
# ----------------------------------------------------------------------------
def _logistic_classifier_kernel(apply_softmax):
    def kernel(x_ref, w1_ref, b1_ref, w2_ref, b2_ref, out_ref):
        # fc1: a1 = x @ W1 + b1   (f32 operands, f32 MXU accumulate)
        a1 = jnp.dot(x_ref[...], w1_ref[...],
                     preferred_element_type=jnp.float32)
        a1 = a1 + b1_ref[...]                     # (1, H) broadcasts over rows
        # fc2: y = a1 @ W2 + b2
        y = jnp.dot(a1, w2_ref[...],
                    preferred_element_type=jnp.float32)
        y = y + b2_ref[...]                       # (1, O) broadcasts over rows
        if apply_softmax:
            # Numerically stable softmax over dim=1 with an exact divide so
            # every row sums to 1 (kernel is DMA/overhead-bound, not EUP-bound,
            # so the approx reciprocal saved nothing and cost accuracy).
            m = jnp.max(y, axis=1, keepdims=True)
            e = jnp.exp(y - m)
            y = e / jnp.sum(e, axis=1, keepdims=True)
        out_ref[...] = y.astype(out_ref.dtype)
    return kernel


# ----------------------------------------------------------------------------
# Sizing helpers
# ----------------------------------------------------------------------------
def _round_up(v, m):
    return ((v + m - 1) // m) * m


def _vmem_capacity_bytes():
    """Per-core VMEM capacity (v5e/v6e: 128 MiB, v7x: 64 MiB).  Conservative
    64 MiB fallback if the query is unavailable."""
    try:
        info = pltpu.get_tpu_info()
        cap = int(getattr(info, "vmem_capacity_bytes", 0))
        if cap > 0:
            return cap
    except Exception:
        pass
    return 64 << 20


def _choose_tile_and_vmem_limit(B, D_in, H, O, vmem_cap, batch_tile):
    """Pick a batch tile that (a) streams >= ~2 MiB of x per grid step so the
    ~0.35 us/step pipeline bookkeeping is amortised, (b) fits the per-core
    VMEM budget (double-buffered x/out tiles + f32 intermediates + resident
    weights), (c) is a multiple of 8, and (d) gives an even number of grid
    steps so the 'parallel' axis splits across both v7x TensorCores.
    Returns (tile_b, vmem_limit_bytes)."""
    weight_bytes = 4 * (D_in * H + H + H * O + O)
    # Per streamed row: 2x-buffered x + 2x-buffered out + a1 + softmax temps.
    per_row_bytes = 4 * (2 * D_in + 2 * O + H + O)
    headroom = 2 << 20

    if batch_tile is not None:
        tile_b = max(1, int(batch_tile))
    else:
        target_x_bytes = 2 << 20                      # >= ~2 MiB of x per step
        tile_b = max(512, target_x_bytes // (4 * D_in))

    # Biggest tile that still fits VMEM (weights counted double-buffered to be
    # conservative in case the single-buffer request is not honored).
    max_rows = max(8, (vmem_cap - 2 * weight_bytes - headroom) // per_row_bytes)
    tile_b = min(tile_b, max_rows)

    if tile_b >= B:
        tile_b = B                                    # one full-batch block
    else:
        tile_b = max(8, (tile_b // 8) * 8)            # multiple-of-8 blocks
        steps = -(-B // tile_b)
        if steps > 1 and steps % 2 == 1:              # even steps for 2-TC v7x
            tile_b = max(8, _round_up(-(-B // (steps + 1)), 8))

    needed = tile_b * per_row_bytes + 2 * weight_bytes + headroom
    vmem_limit = int(min(vmem_cap, max(needed + needed // 4, 32 << 20)))
    return tile_b, vmem_limit


# ----------------------------------------------------------------------------
# pallas_call wrappers
# ----------------------------------------------------------------------------
def _small_forward(x, w1, b1_2d, w2, b2_2d, apply_softmax, vmem_limit_bytes):
    """No grid: everything VMEM-resident, single kernel invocation (no
    per-step pipeline bookkeeping, no double buffers)."""
    B = x.shape[0]
    O = w2.shape[1]
    vmem = pl.BlockSpec(memory_space=pltpu.MemorySpace.VMEM)
    return pl.pallas_call(
        _logistic_classifier_kernel(apply_softmax),
        out_shape=jax.ShapeDtypeStruct((B, O), jnp.float32),
        in_specs=[vmem, vmem, vmem, vmem, vmem],
        out_specs=vmem,
        compiler_params=pltpu.CompilerParams(
            vmem_limit_bytes=vmem_limit_bytes),
    )(x, w1, b1_2d, w2, b2_2d)


def _tiled_forward(x, w1, b1_2d, w2, b2_2d, apply_softmax, tile_b,
                   vmem_limit_bytes, single_buffer_weights):
    """Batch-tiled path: x/out are streamed, weights stay VMEM-resident
    (constant index_map) and -- when supported -- single-buffered."""
    B, D_in = x.shape
    H = w1.shape[1]
    O = w2.shape[1]
    weight_kwargs = (
        dict(pipeline_mode=pl.Buffered(1)) if single_buffer_weights else {})
    return pl.pallas_call(
        _logistic_classifier_kernel(apply_softmax),
        out_shape=jax.ShapeDtypeStruct((B, O), jnp.float32),
        grid=(pl.cdiv(B, tile_b),),
        in_specs=[
            pl.BlockSpec((tile_b, D_in), lambda i: (i, 0)),               # x: streamed
            pl.BlockSpec((D_in, H), lambda i: (0, 0), **weight_kwargs),   # w1: resident
            pl.BlockSpec((1, H),    lambda i: (0, 0), **weight_kwargs),   # b1: resident
            pl.BlockSpec((H, O),    lambda i: (0, 0), **weight_kwargs),   # w2: resident
            pl.BlockSpec((1, O),    lambda i: (0, 0), **weight_kwargs),   # b2: resident
        ],
        out_specs=pl.BlockSpec((tile_b, O), lambda i: (i, 0)),
        compiler_params=pltpu.CompilerParams(
            dimension_semantics=("parallel",),
            vmem_limit_bytes=vmem_limit_bytes),
    )(x, w1, b1_2d, w2, b2_2d)


def logistic_classifier_forward(x, w1, b1, w2, b2, apply_softmax=False,
                                batch_tile=None, force_tiled=False):
    """Pallas forward for LogisticClassifier.

    x : (B, D_in)   float32
    w1: (D_in, H)   float32  (transposed vs. PyTorch's (H, D_in))
    b1: (H,)        float32
    w2: (H, O)      float32  (transposed vs. PyTorch's (O, H))
    b2: (O,)        float32
    returns (B, O)  float32 (logits, or probabilities if apply_softmax)
    """
    B, D_in = x.shape
    H = w1.shape[1]
    O = w2.shape[1]
    b1_2d = b1.reshape(1, H)
    b2_2d = b2.reshape(1, O)

    vmem_cap = _vmem_capacity_bytes()
    weight_bytes = 4 * (D_in * H + H + H * O + O)
    # Byte-based dispatch: take the no-grid path only when x, the f32
    # intermediates (a1, y) and all weights comfortably fit in scoped VMEM.
    resident_bytes = 4 * B * (D_in + H + 2 * O) + weight_bytes
    if not force_tiled and resident_bytes <= vmem_cap // 4:
        vmem_limit = int(min(vmem_cap,
                             max(2 * resident_bytes + (1 << 20), 32 << 20)))
        return _small_forward(x, w1, b1_2d, w2, b2_2d, apply_softmax,
                              vmem_limit)

    tile_b, vmem_limit = _choose_tile_and_vmem_limit(
        B, D_in, H, O, vmem_cap, batch_tile)
    try:
        return _tiled_forward(x, w1, b1_2d, w2, b2_2d, apply_softmax, tile_b,
                              vmem_limit, single_buffer_weights=True)
    except Exception:
        # Some jax versions reject pl.Buffered(1) on the top-level grid; fall
        # back to default (double-buffered) resident weights -- still only one
        # DMA per weight since the index_map is constant.
        return _tiled_forward(x, w1, b1_2d, w2, b2_2d, apply_softmax, tile_b,
                              vmem_limit, single_buffer_weights=False)


def init_params(key, input_dim, hidden_dim, output_dim):
    """Deterministic PyTorch-Linear-style init: U(-1/sqrt(fan_in), 1/sqrt(fan_in))."""
    k1, k2, k3, k4 = jax.random.split(key, 4)
    bound1 = 1.0 / jnp.sqrt(jnp.float32(input_dim))
    bound2 = 1.0 / jnp.sqrt(jnp.float32(hidden_dim))
    # Stored as (in, out) so kernel matmuls are x @ W.
    w1 = jax.random.uniform(k1, (input_dim, hidden_dim), jnp.float32, -bound1, bound1)
    b1 = jax.random.uniform(k2, (hidden_dim,), jnp.float32, -bound1, bound1)
    w2 = jax.random.uniform(k3, (hidden_dim, output_dim), jnp.float32, -bound2, bound2)
    b2 = jax.random.uniform(k4, (output_dim,), jnp.float32, -bound2, bound2)
    return w1, b1, w2, b2


if __name__ == "__main__":
    key = jax.random.PRNGKey(0)
    k_x, k_p = jax.random.split(key)

    batch, input_dim, hidden_dim, output_dim = 8, 32, 64, 16
    x = jax.random.normal(k_x, (batch, input_dim), jnp.float32)
    w1, b1, w2, b2 = init_params(k_p, input_dim, hidden_dim, output_dim)

    # Small (no-grid) path: logits and softmax probabilities.
    y_logits = logistic_classifier_forward(x, w1, b1, w2, b2, apply_softmax=False)
    y_probs = logistic_classifier_forward(x, w1, b1, w2, b2, apply_softmax=True)
    jax.block_until_ready(y_logits)
    jax.block_until_ready(y_probs)

    # Batch-tiled path (small tile so the test stays tiny).  batch_tile=12
    # also exercises the multiple-of-8 rounding of user-supplied tiles.
    x_big = jax.random.normal(k_x, (16, input_dim), jnp.float32)
    y_big = logistic_classifier_forward(x_big, w1, b1, w2, b2,
                                        apply_softmax=True,
                                        batch_tile=8, force_tiled=True)
    y_big2 = logistic_classifier_forward(x_big, w1, b1, w2, b2,
                                         apply_softmax=True,
                                         batch_tile=12, force_tiled=True)
    jax.block_until_ready(y_big)
    jax.block_until_ready(y_big2)

    # Reference checks against plain JAX.
    ref_logits = (x @ w1 + b1) @ w2 + b2
    ref_probs = jax.nn.softmax(ref_logits, axis=1)
    ref_big = jax.nn.softmax((x_big @ w1 + b1) @ w2 + b2, axis=1)
    assert jnp.allclose(y_logits, ref_logits, atol=1e-4, rtol=1e-4)
    assert jnp.allclose(y_probs, ref_probs, atol=1e-5, rtol=1e-4)
    assert jnp.allclose(y_big, ref_big, atol=1e-5, rtol=1e-4)
    assert jnp.allclose(y_big2, ref_big, atol=1e-5, rtol=1e-4)

    print("KERNEL_OK")
</pallas_src>

<mosaic_0001>
module attributes {stable_mosaic.version = 11 : i64} {
  func.func @kernel(%arg0: memref<8x32xf32, #tpu.memory_space<vmem>>, %arg1: memref<32x64xf32, #tpu.memory_space<vmem>>, %arg2: memref<1x64xf32, #tpu.memory_space<vmem>>, %arg3: memref<64x16xf32, #tpu.memory_space<vmem>>, %arg4: memref<1x16xf32, #tpu.memory_space<vmem>>, %arg5: memref<8x16xf32, #tpu.memory_space<vmem>>) attributes {dimension_semantics = [], scalar_prefetch = 0 : i64, scratch_operands = 0 : i64, tpu.core_type = #tpu.core_type<tc>} {
    %c0 = arith.constant 0 : index
    %c0_0 = arith.constant 0 : index
    %0 = vector.load %arg0[%c0, %c0_0] : memref<8x32xf32, #tpu.memory_space<vmem>>, vector<8x32xf32>
    %c0_1 = arith.constant 0 : index
    %c0_2 = arith.constant 0 : index
    %1 = vector.load %arg1[%c0_1, %c0_2] : memref<32x64xf32, #tpu.memory_space<vmem>>, vector<32x64xf32>
    %cst = arith.constant dense<0.000000e+00> : vector<8x64xf32>
    %2 = tpu.matmul %0, %1, %cst {dimension_numbers = #tpu.dot_dimension_numbers<[1], [0], [0], [1], [0, 0, 1, 1], [], []>} : vector<8x32xf32>, vector<32x64xf32>, vector<8x64xf32> -> vector<8x64xf32>
    %c0_3 = arith.constant 0 : index
    %c0_4 = arith.constant 0 : index
    %3 = vector.load %arg2[%c0_3, %c0_4] : memref<1x64xf32, #tpu.memory_space<vmem>>, vector<1x64xf32>
    %4 = vector.broadcast %3 : vector<1x64xf32> to vector<8x64xf32>
    %5 = arith.addf %2, %4 : vector<8x64xf32>
    %c0_5 = arith.constant 0 : index
    %c0_6 = arith.constant 0 : index
    %6 = vector.load %arg3[%c0_5, %c0_6] : memref<64x16xf32, #tpu.memory_space<vmem>>, vector<64x16xf32>
    %cst_7 = arith.constant dense<0.000000e+00> : vector<8x16xf32>
    %7 = tpu.matmul %5, %6, %cst_7 {dimension_numbers = #tpu.dot_dimension_numbers<[1], [0], [0], [1], [0, 0, 1, 1], [], []>} : vector<8x64xf32>, vector<64x16xf32>, vector<8x16xf32> -> vector<8x16xf32>
    %c0_8 = arith.constant 0 : index
    %c0_9 = arith.constant 0 : index
    %8 = vector.load %arg4[%c0_8, %c0_9] : memref<1x16xf32, #tpu.memory_space<vmem>>, vector<1x16xf32>
    %9 = vector.broadcast %8 : vector<1x16xf32> to vector<8x16xf32>
    %10 = arith.addf %7, %9 : vector<8x16xf32>
    %c0_10 = arith.constant 0 : index
    %c0_11 = arith.constant 0 : index
    %11 = vector.load %arg5[%c0_10, %c0_11] : memref<8x16xf32, #tpu.memory_space<vmem>>, vector<8x16xf32>
    tpu.vector_store %arg5[%c0_10, %c0_11], %10 {strides = array<i32>} : memref<8x16xf32, #tpu.memory_space<vmem>>, vector<8x16xf32>,
    return
  }
}

</mosaic_0001>

<llo_original>
// kernel: tpu_custom_call.1
$region0: #{tpu_custom_call.1}
  #allocation0 [shape = 'u32[]', space=smem, size = 0x4, offset = 0x4, fixed_abs, tag = 'smem constant byte address 0x4 - core index']
  #allocation1 [shape = 'u32[144,128]{1,0:T(1,128)}', space=vmem, size = 0x12000, scoped, tag = 'internal scratch']
  %s0 = inlined_call_operand.vmem [shape: f32[8,32], index: 0, kind: input, shape index: {}]
  %s1 = inlined_call_operand.vmem [shape: f32[32,64], index: 1, kind: input, shape index: {}]
  %s2 = inlined_call_operand.vmem [shape: f32[1,64], index: 2, kind: input, shape index: {}]
  %s3 = inlined_call_operand.vmem [shape: f32[64,16], index: 3, kind: input, shape index: {}]
  %s4 = inlined_call_operand.vmem [shape: f32[1,16], index: 4, kind: input, shape index: {}]
  %s5 = inlined_call_operand.hbm [shape: f32[8,16], index: 5, kind: output, shape index: {}]
  %s6 = sld [smem:[#allocation0]]
  $region30: #{tpu_custom_call.1} parent=0
    _
  %s8 = ssub.s32 1, %s6
  %s9 = scalar_select 0, %s8, %s6
  $region1: #{tpu_custom_call.1} parent=0
    #allocation2 [shape = 'u8[4096]{0}', space=vmem, size = 0x1000, scoped, tag = 'output window, operand 0, single buffered']
    #allocation3 [shape = 's32[1]{0}', space=sflag, size = 0x4, scoped, tag = 'scoped memory for tpu_custom_call.1']
    %10 = vsyncpa [#allocation3], 0
    // Predicated region
    $region2: #{tpu_custom_call.1} parent=1 // pred_check
      _
    $region3: #{tpu_custom_call.1} parent=1 // pred_check_branch
      %12 = sbr.rel (0) target = $region5
    $region4: #{tpu_custom_call.1} parent=1 // pred_region
      _
    $region5: #{tpu_custom_call.1} parent=1 // pred_fallthru
      _
    // Predicated region
    $region6: #{tpu_custom_call.1} parent=1 // pred_check
      _
    $region7: #{tpu_custom_call.1} parent=1 // pred_check_branch
      %14 = sbr.rel (0) target = $region9
    $region8: #{tpu_custom_call.1} parent=1 // pred_region
      _
    $region9: #{tpu_custom_call.1} parent=1 // pred_fallthru
      _
    // Predicated region
    $region10: #{tpu_custom_call.1} parent=1 // pred_check
      _
    $region11: #{tpu_custom_call.1} parent=1 // pred_check_branch
      %16 = sbr.rel (0) target = $region13
    $region12: #{tpu_custom_call.1} parent=1 // pred_region
      _
    $region13: #{tpu_custom_call.1} parent=1 // pred_fallthru
      _
    // Predicated region
    $region14: #{tpu_custom_call.1} parent=1 // pred_check
      _
    $region15: #{tpu_custom_call.1} parent=1 // pred_check_branch
      %18 = sbr.rel (0) target = $region17
    $region16: #{tpu_custom_call.1} parent=1 // pred_region
      _
    $region17: #{tpu_custom_call.1} parent=1 // pred_fallthru
      _
    // Predicated region
    $region18: #{tpu_custom_call.1} parent=1 // pred_check
      _
    $region19: #{tpu_custom_call.1} parent=1 // pred_check_branch
      %20 = sbr.rel (0) target = $region21
    $region20: #{tpu_custom_call.1} parent=1 // pred_region
      _
    $region21: #{tpu_custom_call.1} parent=1 // pred_fallthru
      _
    %v21 = vld [vmem:[%s0] sm:$0xff]
    %v22 = vld [vmem:[%s1] sm:$0xff]
    %v23 = vld [vmem:[%s1 + $0x8] sm:$0xff]
    %v24 = vld [vmem:[%s1 + $0x10] sm:$0xff]
    %v25 = vld [vmem:[%s1 + $0x18] sm:$0xff]
    %v26 = vld [vmem:[%s2] sm:$0x1]
    %v28 = vlaneseq
    %v29 = vshrl.u32 %v28, 7
    %v30 = vsub.s32 0, %v29
    %v31 = vrot.slane %v26, %v30
    %vm33 = vcmask 261120
    %v35 = vsel %vm33, %v21, 0
    %37 = vmatprep.subr.mxu0 0.0
    %38 = vmatpush1.msra.mxu0 %v22
    %39 = vmatprep.subr.mxu0 0.0
    %40 = vmatpush1.msra.mxu0 %v23
    %41 = vmatprep.subr.mxu0 0.0
    %42 = vmatpush1.msra.mxu0 %v24
    %43 = vmatprep.subr.mxu0 0.0
    %44 = vmatpush1.msra.mxu0 %v25
    %45 = vmatprep.subr.mxu0 0.0
    %46 = vmatpush1.msra.mxu0 0.0
    %47 = vmatprep.subr.mxu0 0.0
    %48 = vmatpush1.msra.mxu0 0.0
    %49 = vmatprep.subr.mxu0 0.0
    %50 = vmatpush1.msra.mxu0 0.0
    %51 = vmatprep.subr.mxu0 0.0
    %52 = vmatpush1.msra.mxu0 0.0
    %53 = vmatprep.subr.mxu0 0.0
    %54 = vmatpush1.msra.mxu0 0.0
    %55 = vmatprep.subr.mxu0 0.0
    %56 = vmatpush1.msra.mxu0 0.0
    %57 = vmatprep.subr.mxu0 0.0
    %58 = vmatpush1.msra.mxu0 0.0
    %59 = vmatprep.subr.mxu0 0.0
    %60 = vmatpush1.msra.mxu0 0.0
    %61 = vmatprep.subr.mxu0 0.0
    %62 = vmatpush1.msra.mxu0 0.0
    %63 = vmatprep.subr.mxu0 0.0
    %64 = vmatpush1.msra.mxu0 0.0
    %65 = vmatprep.subr.mxu0 0.0
    %66 = vmatpush1.msra.mxu0 0.0
    %67 = vmatprep.subr.mxu0 0.0
    %68 = vmatpush1.msra.mxu0 0.0
    %69 = vmatprep.subr.mxu0 0.0
    %70 = vmatpush1.msra.mxu0 0.0
    %71 = vmatprep.subr.mxu0 0.0
    %72 = vmatpush1.msra.mxu0 0.0
    %73 = vmatprep.subr.mxu0 0.0
    %74 = vmatpush1.msra.mxu0 0.0
    %75 = vmatprep.subr.mxu0 0.0
    %76 = vmatpush1.msra.mxu0 0.0
    %77 = vmatprep.subr.mxu0 0.0
    %78 = vmatpush1.msra.mxu0 0.0
    %79 = vmatprep.subr.mxu0 0.0
    %80 = vmatpush1.msra.mxu0 0.0
    %81 = vmatprep.subr.mxu0 0.0
    %82 = vmatpush1.msra.mxu0 0.0
    %83 = vmatprep.subr.mxu0 0.0
    %84 = vmatpush1.msra.mxu0 0.0
    %85 = vmatprep.subr.mxu0 0.0
    %86 = vmatpush1.msra.mxu0 0.0
    %87 = vmatprep.subr.mxu0 0.0
    %88 = vmatpush1.msra.mxu0 0.0
    %89 = vmatprep.subr.mxu0 0.0
    %90 = vmatpush1.msra.mxu0 0.0
    %91 = vmatprep.subr.mxu0 0.0
    %92 = vmatpush1.msra.mxu0 0.0
    %93 = vmatprep.subr.mxu0 0.0
    %94 = vmatpush1.msra.mxu0 0.0
    %95 = vmatprep.subr.mxu0 0.0
    %96 = vmatpush1.msra.mxu0 0.0
    %97 = vmatprep.subr.mxu0 0.0
    %98 = vmatpush1.msra.mxu0 0.0
    %99 = vmatprep.subr.mxu0 0.0
    %100 = vmatpush1.msra.mxu0 0.0
    %101 = vmatprep.mubr.f32.mxu0 0.0
    %102 = vmatmul.mubr.f32.gmra.mrb[0].mxu0 %v35
    %v103 = vpop.f32.mrb[0].mxu0
    %v104 = vadd.f32 %v31, %v103
    %v105 = vpop.f32.mrb[0].mxu0
    %106 = vdwg.mxu0
    %v107 = vld [vmem:[%s3] sm:$0xff]
    %v108 = vld [vmem:[%s3 + $0x8] sm:$0xff]
    %v109 = vld [vmem:[%s3 + $0x10] sm:$0xff]
    %v110 = vld [vmem:[%s3 + $0x18] sm:$0xff]
    %v111 = vld [vmem:[%s3 + $0x20] sm:$0xff]
    %v112 = vld [vmem:[%s3 + $0x28] sm:$0xff]
    %v113 = vld [vmem:[%s3 + $0x30] sm:$0xff]
    %v114 = vld [vmem:[%s3 + $0x38] sm:$0xff]
    %v115 = vld [vmem:[%s4] sm:$0x1]
    %v117 = vlaneseq
    %v118 = vshrl.u32 %v117, 7
    %v119 = vsub.s32 0, %v118
    %v120 = vrot.slane %v115, %v119
    %vm122 = vcmask 523264
    %v124 = vsel %vm122, %v104, 0
    %126 = vmatprep.subr.mxu0 0.0
    %127 = vmatpush1.msra.mxu0 %v107
    %128 = vmatprep.subr.mxu0 0.0
    %129 = vmatpush1.msra.mxu0 %v108
    %130 = vmatprep.subr.mxu0 0.0
    %131 = vmatpush1.msra.mxu0 %v109
    %132 = vmatprep.subr.mxu0 0.0
    %133 = vmatpush1.msra.mxu0 %v110
    %134 = vmatprep.subr.mxu0 0.0
    %135 = vmatpush1.msra.mxu0 %v111
    %136 = vmatprep.subr.mxu0 0.0
    %137 = vmatpush1.msra.mxu0 %v112
    %138 = vmatprep.subr.mxu0 0.0
    %139 = vmatpush1.msra.mxu0 %v113
    %140 = vmatprep.subr.mxu0 0.0
    %141 = vmatpush1.msra.mxu0 %v114
    %142 = vmatprep.subr.mxu0 0.0
    %143 = vmatpush1.msra.mxu0 0.0
    %144 = vmatprep.subr.mxu0 0.0
    %145 = vmatpush1.msra.mxu0 0.0
    %146 = vmatprep.subr.mxu0 0.0
    %147 = vmatpush1.msra.mxu0 0.0
    %148 = vmatprep.subr.mxu0 0.0
    %149 = vmatpush1.msra.mxu0 0.0
    %150 = vmatprep.subr.mxu0 0.0
    %151 = vmatpush1.msra.mxu0 0.0
    %152 = vmatprep.subr.mxu0 0.0
    %153 = vmatpush1.msra.mxu0 0.0
    %154 = vmatprep.subr.mxu0 0.0
    %155 = vmatpush1.msra.mxu0 0.0
    %156 = vmatprep.subr.mxu0 0.0
    %157 = vmatpush1.msra.mxu0 0.0
    %158 = vmatprep.subr.mxu0 0.0
    %159 = vmatpush1.msra.mxu0 0.0
    %160 = vmatprep.subr.mxu0 0.0
    %161 = vmatpush1.msra.mxu0 0.0
    %162 = vmatprep.subr.mxu0 0.0
    %163 = vmatpush1.msra.mxu0 0.0
    %164 = vmatprep.subr.mxu0 0.0
    %165 = vmatpush1.msra.mxu0 0.0
    %166 = vmatprep.subr.mxu0 0.0
    %167 = vmatpush1.msra.mxu0 0.0
    %168 = vmatprep.subr.mxu0 0.0
    %169 = vmatpush1.msra.mxu0 0.0
    %170 = vmatprep.subr.mxu0 0.0
    %171 = vmatpush1.msra.mxu0 0.0
    %172 = vmatprep.subr.mxu0 0.0
    %173 = vmatpush1.msra.mxu0 0.0
    %174 = vmatprep.subr.mxu0 0.0
    %175 = vmatpush1.msra.mxu0 0.0
    %176 = vmatprep.subr.mxu0 0.0
    %177 = vmatpush1.msra.mxu0 0.0
    %178 = vmatprep.subr.mxu0 0.0
    %179 = vmatpush1.msra.mxu0 0.0
    %180 = vmatprep.subr.mxu0 0.0
    %181 = vmatpush1.msra.mxu0 0.0
    %182 = vmatprep.subr.mxu0 0.0
    %183 = vmatpush1.msra.mxu0 0.0
    %184 = vmatprep.subr.mxu0 0.0
    %185 = vmatpush1.msra.mxu0 0.0
    %186 = vmatprep.subr.mxu0 0.0
    %187 = vmatpush1.msra.mxu0 0.0
    %188 = vmatprep.subr.mxu0 0.0
    %189 = vmatpush1.msra.mxu0 0.0
    %190 = vmatprep.mubr.f32.mxu0 0.0
    %191 = vmatmul.mubr.f32.gmra.mrb[0].mxu0 %v124
    %v192 = vpop.f32.mrb[0].mxu0
    %v193 = vadd.f32 %v120, %v192
    %v194 = vpop.f32.mrb[0].mxu0
    %195 = vdwg.mxu0
    %vm196 = vcmask 130048
    %197 = vst.msk [vmem:[#allocation2] sm:$0xff] %vm196, %v193
    // Predicated region
    $region22: #{tpu_custom_call.1} parent=1 // pred_check
      _
    $region23: #{tpu_custom_call.1} parent=1 // pred_check_branch
      %199 = sbr.rel (0) target = $region25
    $region24: #{tpu_custom_call.1} parent=1 // pred_region
      %s201 = ssub.s32 128, 128
      %202 = vsyncadd [#allocation3], %s201
      %s204 = sshll.u32 [#allocation2], 4
      %s205 = int_to_ptr.vmem [resolvable:$true] %s204
      %207 = dma.vmem_to_hbm [thread:$0]  %s205, 128, %s5, [#allocation3]
    $region25: #{tpu_custom_call.1} parent=1 // pred_fallthru
      _
    // Predicated region
    $region26: #{tpu_custom_call.1} parent=1 // pred_check
      _
    $region27: #{tpu_custom_call.1} parent=1 // pred_check_branch
      %209 = sbr.rel (0) target = $region29
    $region28: #{tpu_custom_call.1} parent=1 // pred_region
      %210 = dma.done [#allocation3], 128
    $region29: #{tpu_custom_call.1} parent=1 // pred_fallthru
      _
    %211 = vsyncpa [#allocation3], 1

</llo_original>
